<compile_context>
chip_gen: v6e
topology: v6e:2x2x1
jax: 0.10.0
libtpu: 0.0.40
codegen_flags: <defaults>
</compile_context>

<pallas_src>
import functools

import jax
import jax.numpy as jnp
from jax.experimental import pallas as pl
from jax.experimental.pallas import tpu as pltpu

EPS = 1e-5                       # nn.InstanceNorm1d default eps
LAYERS = (64, 64, 48, 32, 16, 16)
LANE = 128                       # vreg lane width -> batch tile granularity
MAX_TILE_N = 8192                # samples (lanes) per grid step


# ---------------- kernel ----------------

def _fused_norm_mlp_kernel(x_ref, *refs, act_dtype):
    """InstanceNorm + fc1..fc7 chain with the batch on the lane (last) axis.

    x_ref:  (D, TILE_N) f32   -- one sample per lane (column)
    refs:   w1, b1, ..., w7, b7, o_ref
            wi: (out_i, in_i)  PyTorch-native layout, bf16 or f32
            bi: (out_i, 1)     f32
    o_ref:  (OUT, TILE_N) f32 -- lane-dense output block
    """
    o_ref = refs[-1]
    wb = refs[:-1]
    n_layers = len(wb) // 2

    # --- InstanceNorm1d (affine=False): per-sample (per column) over the
    #     feature axis (sublanes); biased variance, matching PyTorch. ---
    x = x_ref[...]                                    # (D, TILE_N) f32
    mean = jnp.mean(x, axis=0, keepdims=True)         # (1, TILE_N)
    xc = x - mean
    var = jnp.mean(xc * xc, axis=0, keepdims=True)
    h = (xc * jax.lax.rsqrt(var + EPS)).astype(act_dtype)

    # --- fc1..fc7: z = W @ h + b, tanh after all but the last layer.
    #     Batch stays on lanes -> dense vregs everywhere; f32 accumulation. ---
    for i in range(n_layers):
        w = wb[2 * i][...]                            # (out, in)
        b = wb[2 * i + 1][...]                        # (out, 1) f32
        z = jnp.dot(w, h.astype(w.dtype), preferred_element_type=jnp.float32) + b
        if i < n_layers - 1:
            h = jnp.tanh(z.astype(act_dtype))
        else:
            h = z                                     # f32
    o_ref[...] = h.astype(o_ref.dtype)


# ---------------- wrappers ----------------

def _cdiv(a, b):
    return -(-a // b)


def _round_up(a, m):
    return _cdiv(a, m) * m


def _choose_tiles(n):
    """Pick (tile_n, padded_n, num_tiles): big tiles, small pad waste,
    and >=2 grid steps (for the two v7x TensorCores) whenever possible."""
    num_tiles = max(1, _cdiv(n, MAX_TILE_N))
    if num_tiles < 2 and n >= 2 * LANE:
        num_tiles = 2                       # lets "parallel" use both TCs on v7x
    tile_n = _round_up(_cdiv(n, num_tiles), LANE)
    padded_n = tile_n * num_tiles
    return tile_n, padded_n, num_tiles


def _default_act_dtype():
    """bf16 activations/tanh on v6e/v7x (bf16 VPU/EUP); f32 on v5e and older."""
    try:
        kind = jax.devices()[0].device_kind.lower()
    except Exception:
        return jnp.float32
    if any(tag in kind for tag in ("v2", "v3", "v4", "v5")):
        return jnp.float32
    return jnp.bfloat16


def _forward_impl(x, params, act_dtype):
    n, c, l = x.shape
    if c != 1:
        # TODO(synk): for C > 1 the InstanceNorm would have to run per-(n, c)
        # over L before flattening; this kernel assumes the common C == 1 case.
        raise ValueError("build_network_TEST Pallas kernel assumes C == 1")
    d = c * l
    out_dim = params[-1][1].shape[0]

    tile_n, padded_n, num_tiles = _choose_tiles(n)

    # Flatten, pad the batch to a whole number of lane tiles, and put the
    # batch on the lane (last) axis.  Zero-padded samples normalize to 0
    # (no NaNs) and are sliced off at the end.
    x2 = x.astype(jnp.float32).reshape(n, d)
    if padded_n != n:
        x2 = jnp.pad(x2, ((0, padded_n - n), (0, 0)))
    xt = x2.T                                          # (d, padded_n)

    flat_args = []
    in_specs = [pl.BlockSpec((d, tile_n), lambda i: (0, i))]
    for w, b in params:
        flat_args.extend([w, b])
        # Constant index_maps -> DMA'd once, VMEM-resident across batch tiles.
        in_specs.append(pl.BlockSpec(w.shape, lambda i: (0, 0)))
        in_specs.append(pl.BlockSpec(b.shape, lambda i: (0, 0)))

    out = pl.pallas_call(
        functools.partial(_fused_norm_mlp_kernel, act_dtype=act_dtype),
        out_shape=jax.ShapeDtypeStruct((out_dim, padded_n), jnp.float32),
        grid=(num_tiles,),
        in_specs=in_specs,
        out_specs=pl.BlockSpec((out_dim, tile_n), lambda i: (0, i)),
        compiler_params=pltpu.CompilerParams(
            dimension_semantics=("parallel",),
            vmem_limit_bytes=32 * 1024 * 1024),
    )(xt, *flat_args)
    return out[:, :n].T                                # (n, out_dim) f32


build_network_test_forward = jax.jit(_forward_impl, static_argnames="act_dtype")


def init_params(key, input_size, output_size):
    """nn.Linear default init U(-1/sqrt(fan_in), 1/sqrt(fan_in)).
    Weights kept PyTorch-native (out, in); biases stored as (out, 1)."""
    dims = (input_size,) + LAYERS + (output_size,)
    params = []
    for i in range(len(dims) - 1):
        fan_in, fan_out = dims[i], dims[i + 1]
        key, kw, kb = jax.random.split(key, 3)
        bound = float(1.0 / (fan_in ** 0.5))
        w = jax.random.uniform(kw, (fan_out, fan_in), jnp.float32, -bound, bound)
        b = jax.random.uniform(kb, (fan_out, 1), jnp.float32, -bound, bound)
        params.append((w, b))
    return params


def prepare_params(params, weight_dtype=jnp.bfloat16):
    """Pre-cast weights ONCE (not per forward call); biases stay f32."""
    return [(w.astype(weight_dtype), b) for w, b in params]


def _reference_forward(x, params):
    """Pure-JAX f32 reference matching the PyTorch forward()."""
    x = x.astype(jnp.float32)
    mean = jnp.mean(x, axis=-1, keepdims=True)
    var = jnp.mean((x - mean) ** 2, axis=-1, keepdims=True)
    h = ((x - mean) * jax.lax.rsqrt(var + EPS)).reshape(x.shape[0], -1)
    for i, (w, b) in enumerate(params):
        h = h @ w.astype(jnp.float32).T + b[:, 0]
        if i < len(params) - 1:
            h = jnp.tanh(h)
    return h


if __name__ == "__main__":
    batch, channels, input_size, output_size = 2, 1, 32, 4

    key = jax.random.PRNGKey(0)
    kx, kp = jax.random.split(key)
    x = jax.random.normal(kx, (batch, channels, input_size), jnp.float32)
    params_f32 = init_params(kp, channels * input_size, output_size)

    # 1) full-precision path: validate against the pure-JAX reference.
    out_f32 = build_network_test_forward(x, params_f32, jnp.float32)
    jax.block_until_ready(out_f32)
    ref = _reference_forward(x, params_f32)
    max_err = float(jnp.max(jnp.abs(out_f32 - ref)))
    assert out_f32.shape == (batch, output_size)
    assert max_err < 1e-2, f"f32 path mismatch: max abs err {max_err}"

    # 2) fast path: bf16 weights, chip-appropriate activation dtype
    #    (deliberate speed/accuracy tradeoff; checked with a loose tolerance).
    act_dtype = _default_act_dtype()
    params_fast = prepare_params(params_f32, jnp.bfloat16)
    out = build_network_test_forward(x, params_fast, act_dtype)
    jax.block_until_ready(out)
    max_err_fast = float(jnp.max(jnp.abs(out - ref)))
    assert out.shape == (batch, output_size)
    assert out.dtype == jnp.float32
    assert max_err_fast < 1e-1, f"fast path mismatch: max abs err {max_err_fast}"

    print("KERNEL_OK")
</pallas_src>

<mosaic_0001>
module attributes {stable_mosaic.version = 11 : i64} {
  func.func @_fused_norm_mlp_kernel(%arg0: i32, %arg1: memref<32x128xf32, #tpu.memory_space<vmem>>, %arg2: memref<64x32xf32, #tpu.memory_space<vmem>>, %arg3: memref<64x1xf32, #tpu.memory_space<vmem>>, %arg4: memref<64x64xf32, #tpu.memory_space<vmem>>, %arg5: memref<64x1xf32, #tpu.memory_space<vmem>>, %arg6: memref<48x64xf32, #tpu.memory_space<vmem>>, %arg7: memref<48x1xf32, #tpu.memory_space<vmem>>, %arg8: memref<32x48xf32, #tpu.memory_space<vmem>>, %arg9: memref<32x1xf32, #tpu.memory_space<vmem>>, %arg10: memref<16x32xf32, #tpu.memory_space<vmem>>, %arg11: memref<16x1xf32, #tpu.memory_space<vmem>>, %arg12: memref<16x16xf32, #tpu.memory_space<vmem>>, %arg13: memref<16x1xf32, #tpu.memory_space<vmem>>, %arg14: memref<4x16xf32, #tpu.memory_space<vmem>>, %arg15: memref<4x1xf32, #tpu.memory_space<vmem>>, %arg16: memref<4x128xf32, #tpu.memory_space<vmem>>) attributes {dimension_semantics = [#tpu.dimension_semantics<parallel>], iteration_bounds = array<i64: 1>, scalar_prefetch = 0 : i64, scratch_operands = 0 : i64, tpu.core_type = #tpu.core_type<tc>, window_params = [{transform_indices = @transform_0, window_bounds = array<i64: 32, 128>}, {pipeline_mode = #tpu.pipeline_mode<synchronous>, transform_indices = @transform_1, window_bounds = array<i64: 64, 32>}, {pipeline_mode = #tpu.pipeline_mode<synchronous>, transform_indices = @transform_2, window_bounds = array<i64: 64, 1>}, {pipeline_mode = #tpu.pipeline_mode<synchronous>, transform_indices = @transform_3, window_bounds = array<i64: 64, 64>}, {pipeline_mode = #tpu.pipeline_mode<synchronous>, transform_indices = @transform_4, window_bounds = array<i64: 64, 1>}, {pipeline_mode = #tpu.pipeline_mode<synchronous>, transform_indices = @transform_5, window_bounds = array<i64: 48, 64>}, {pipeline_mode = #tpu.pipeline_mode<synchronous>, transform_indices = @transform_6, window_bounds = array<i64: 48, 1>}, {pipeline_mode = #tpu.pipeline_mode<synchronous>, transform_indices = @transform_7, window_bounds = array<i64: 32, 48>}, {pipeline_mode = #tpu.pipeline_mode<synchronous>, transform_indices = @transform_8, window_bounds = array<i64: 32, 1>}, {pipeline_mode = #tpu.pipeline_mode<synchronous>, transform_indices = @transform_9, window_bounds = array<i64: 16, 32>}, {pipeline_mode = #tpu.pipeline_mode<synchronous>, transform_indices = @transform_10, window_bounds = array<i64: 16, 1>}, {pipeline_mode = #tpu.pipeline_mode<synchronous>, transform_indices = @transform_11, window_bounds = array<i64: 16, 16>}, {pipeline_mode = #tpu.pipeline_mode<synchronous>, transform_indices = @transform_12, window_bounds = array<i64: 16, 1>}, {pipeline_mode = #tpu.pipeline_mode<synchronous>, transform_indices = @transform_13, window_bounds = array<i64: 4, 16>}, {pipeline_mode = #tpu.pipeline_mode<synchronous>, transform_indices = @transform_14, window_bounds = array<i64: 4, 1>}, {transform_indices = @transform_15, window_bounds = array<i64: 4, 128>}]} {
    %c0 = arith.constant 0 : index
    %c0_0 = arith.constant 0 : index
    %0 = vector.load %arg1[%c0, %c0_0] : memref<32x128xf32, #tpu.memory_space<vmem>>, vector<32x128xf32>
    %cst = arith.constant dense<0.000000e+00> : vector<128xf32>
    %1 = vector.multi_reduction <add>, %0, %cst [0] : vector<32x128xf32> to vector<128xf32>
    %2 = vector.shape_cast %1 : vector<128xf32> to vector<1x128xf32>
    %cst_1 = arith.constant 3.200000e+01 : f32
    %3 = vector.broadcast %cst_1 : f32 to vector<1x128xf32>
    %4 = arith.divf %2, %3 : vector<1x128xf32>
    %5 = vector.broadcast %4 : vector<1x128xf32> to vector<32x128xf32>
    %6 = arith.subf %0, %5 : vector<32x128xf32>
    %7 = arith.mulf %6, %6 : vector<32x128xf32>
    %cst_2 = arith.constant dense<0.000000e+00> : vector<128xf32>
    %8 = vector.multi_reduction <add>, %7, %cst_2 [0] : vector<32x128xf32> to vector<128xf32>
    %9 = vector.shape_cast %8 : vector<128xf32> to vector<1x128xf32>
    %cst_3 = arith.constant 3.200000e+01 : f32
    %10 = vector.broadcast %cst_3 : f32 to vector<1x128xf32>
    %11 = arith.divf %9, %10 : vector<1x128xf32>
    %cst_4 = arith.constant 9.99999974E-6 : f32
    %12 = vector.broadcast %cst_4 : f32 to vector<1x128xf32>
    %13 = arith.addf %11, %12 : vector<1x128xf32>
    %14 = math.rsqrt %13 : vector<1x128xf32>
    %15 = vector.broadcast %14 : vector<1x128xf32> to vector<32x128xf32>
    %16 = arith.mulf %6, %15 : vector<32x128xf32>
    %c0_5 = arith.constant 0 : index
    %c0_6 = arith.constant 0 : index
    %17 = vector.load %arg2[%c0_5, %c0_6] : memref<64x32xf32, #tpu.memory_space<vmem>>, vector<64x32xf32>
    %c0_7 = arith.constant 0 : index
    %c0_8 = arith.constant 0 : index
    %18 = vector.load %arg3[%c0_7, %c0_8] : memref<64x1xf32, #tpu.memory_space<vmem>>, vector<64x1xf32>
    %cst_9 = arith.constant dense<0.000000e+00> : vector<64x128xf32>
    %19 = tpu.matmul %17, %16, %cst_9 {dimension_numbers = #tpu.dot_dimension_numbers<[1], [0], [0], [1], [0, 0, 1, 1], [], []>} : vector<64x32xf32>, vector<32x128xf32>, vector<64x128xf32> -> vector<64x128xf32>
    %20 = vector.broadcast %18 : vector<64x1xf32> to vector<64x128xf32>
    %21 = arith.addf %19, %20 : vector<64x128xf32>
    %22 = math.tanh %21 : vector<64x128xf32>
    %c0_10 = arith.constant 0 : index
    %c0_11 = arith.constant 0 : index
    %23 = vector.load %arg4[%c0_10, %c0_11] : memref<64x64xf32, #tpu.memory_space<vmem>>, vector<64x64xf32>
    %c0_12 = arith.constant 0 : index
    %c0_13 = arith.constant 0 : index
    %24 = vector.load %arg5[%c0_12, %c0_13] : memref<64x1xf32, #tpu.memory_space<vmem>>, vector<64x1xf32>
    %cst_14 = arith.constant dense<0.000000e+00> : vector<64x128xf32>
    %25 = tpu.matmul %23, %22, %cst_14 {dimension_numbers = #tpu.dot_dimension_numbers<[1], [0], [0], [1], [0, 0, 1, 1], [], []>} : vector<64x64xf32>, vector<64x128xf32>, vector<64x128xf32> -> vector<64x128xf32>
    %26 = vector.broadcast %24 : vector<64x1xf32> to vector<64x128xf32>
    %27 = arith.addf %25, %26 : vector<64x128xf32>
    %28 = math.tanh %27 : vector<64x128xf32>
    %c0_15 = arith.constant 0 : index
    %c0_16 = arith.constant 0 : index
    %29 = vector.load %arg6[%c0_15, %c0_16] : memref<48x64xf32, #tpu.memory_space<vmem>>, vector<48x64xf32>
    %c0_17 = arith.constant 0 : index
    %c0_18 = arith.constant 0 : index
    %30 = vector.load %arg7[%c0_17, %c0_18] : memref<48x1xf32, #tpu.memory_space<vmem>>, vector<48x1xf32>
    %cst_19 = arith.constant dense<0.000000e+00> : vector<48x128xf32>
    %31 = tpu.matmul %29, %28, %cst_19 {dimension_numbers = #tpu.dot_dimension_numbers<[1], [0], [0], [1], [0, 0, 1, 1], [], []>} : vector<48x64xf32>, vector<64x128xf32>, vector<48x128xf32> -> vector<48x128xf32>
    %32 = vector.broadcast %30 : vector<48x1xf32> to vector<48x128xf32>
    %33 = arith.addf %31, %32 : vector<48x128xf32>
    %34 = math.tanh %33 : vector<48x128xf32>
    %c0_20 = arith.constant 0 : index
    %c0_21 = arith.constant 0 : index
    %35 = vector.load %arg8[%c0_20, %c0_21] : memref<32x48xf32, #tpu.memory_space<vmem>>, vector<32x48xf32>
    %c0_22 = arith.constant 0 : index
    %c0_23 = arith.constant 0 : index
    %36 = vector.load %arg9[%c0_22, %c0_23] : memref<32x1xf32, #tpu.memory_space<vmem>>, vector<32x1xf32>
    %cst_24 = arith.constant dense<0.000000e+00> : vector<32x128xf32>
    %37 = tpu.matmul %35, %34, %cst_24 {dimension_numbers = #tpu.dot_dimension_numbers<[1], [0], [0], [1], [0, 0, 1, 1], [], []>} : vector<32x48xf32>, vector<48x128xf32>, vector<32x128xf32> -> vector<32x128xf32>
    %38 = vector.broadcast %36 : vector<32x1xf32> to vector<32x128xf32>
    %39 = arith.addf %37, %38 : vector<32x128xf32>
    %40 = math.tanh %39 : vector<32x128xf32>
    %c0_25 = arith.constant 0 : index
    %c0_26 = arith.constant 0 : index
    %41 = vector.load %arg10[%c0_25, %c0_26] : memref<16x32xf32, #tpu.memory_space<vmem>>, vector<16x32xf32>
    %c0_27 = arith.constant 0 : index
    %c0_28 = arith.constant 0 : index
    %42 = vector.load %arg11[%c0_27, %c0_28] : memref<16x1xf32, #tpu.memory_space<vmem>>, vector<16x1xf32>
    %cst_29 = arith.constant dense<0.000000e+00> : vector<16x128xf32>
    %43 = tpu.matmul %41, %40, %cst_29 {dimension_numbers = #tpu.dot_dimension_numbers<[1], [0], [0], [1], [0, 0, 1, 1], [], []>} : vector<16x32xf32>, vector<32x128xf32>, vector<16x128xf32> -> vector<16x128xf32>
    %44 = vector.broadcast %42 : vector<16x1xf32> to vector<16x128xf32>
    %45 = arith.addf %43, %44 : vector<16x128xf32>
    %46 = math.tanh %45 : vector<16x128xf32>
    %c0_30 = arith.constant 0 : index
    %c0_31 = arith.constant 0 : index
    %47 = vector.load %arg12[%c0_30, %c0_31] : memref<16x16xf32, #tpu.memory_space<vmem>>, vector<16x16xf32>
    %c0_32 = arith.constant 0 : index
    %c0_33 = arith.constant 0 : index
    %48 = vector.load %arg13[%c0_32, %c0_33] : memref<16x1xf32, #tpu.memory_space<vmem>>, vector<16x1xf32>
    %cst_34 = arith.constant dense<0.000000e+00> : vector<16x128xf32>
    %49 = tpu.matmul %47, %46, %cst_34 {dimension_numbers = #tpu.dot_dimension_numbers<[1], [0], [0], [1], [0, 0, 1, 1], [], []>} : vector<16x16xf32>, vector<16x128xf32>, vector<16x128xf32> -> vector<16x128xf32>
    %50 = vector.broadcast %48 : vector<16x1xf32> to vector<16x128xf32>
    %51 = arith.addf %49, %50 : vector<16x128xf32>
    %52 = math.tanh %51 : vector<16x128xf32>
    %c0_35 = arith.constant 0 : index
    %c0_36 = arith.constant 0 : index
    %53 = vector.load %arg14[%c0_35, %c0_36] : memref<4x16xf32, #tpu.memory_space<vmem>>, vector<4x16xf32>
    %c0_37 = arith.constant 0 : index
    %c0_38 = arith.constant 0 : index
    %54 = vector.load %arg15[%c0_37, %c0_38] : memref<4x1xf32, #tpu.memory_space<vmem>>, vector<4x1xf32>
    %cst_39 = arith.constant dense<0.000000e+00> : vector<4x128xf32>
    %55 = tpu.matmul %53, %52, %cst_39 {dimension_numbers = #tpu.dot_dimension_numbers<[1], [0], [0], [1], [0, 0, 1, 1], [], []>} : vector<4x16xf32>, vector<16x128xf32>, vector<4x128xf32> -> vector<4x128xf32>
    %56 = vector.broadcast %54 : vector<4x1xf32> to vector<4x128xf32>
    %57 = arith.addf %55, %56 : vector<4x128xf32>
    %c0_40 = arith.constant 0 : index
    %c0_41 = arith.constant 0 : index
    %58 = vector.load %arg16[%c0_40, %c0_41] : memref<4x128xf32, #tpu.memory_space<vmem>>, vector<4x128xf32>
    tpu.vector_store %arg16[%c0_40, %c0_41], %57 {strides = array<i32>} : memref<4x128xf32, #tpu.memory_space<vmem>>, vector<4x128xf32>,
    return
  }
  func.func @transform_0(%arg0: i32) -> (i32, i32) {
    %c0_i32 = arith.constant 0 : i32
    %c0_i32_0 = arith.constant 0 : i32
    return %c0_i32, %arg0 : i32, i32
  }
  func.func @transform_1(%arg0: i32) -> (i32, i32) {
    %c0_i32 = arith.constant 0 : i32
    %c0_i32_0 = arith.constant 0 : i32
    %c0_i32_1 = arith.constant 0 : i32
    return %c0_i32, %c0_i32_0 : i32, i32
  }
  func.func @transform_2(%arg0: i32) -> (i32, i32) {
    %c0_i32 = arith.constant 0 : i32
    %c0_i32_0 = arith.constant 0 : i32
    %c0_i32_1 = arith.constant 0 : i32
    return %c0_i32, %c0_i32_0 : i32, i32
  }
  func.func @transform_3(%arg0: i32) -> (i32, i32) {
    %c0_i32 = arith.constant 0 : i32
    %c0_i32_0 = arith.constant 0 : i32
    %c0_i32_1 = arith.constant 0 : i32
    return %c0_i32, %c0_i32_0 : i32, i32
  }
  func.func @transform_4(%arg0: i32) -> (i32, i32) {
    %c0_i32 = arith.constant 0 : i32
    %c0_i32_0 = arith.constant 0 : i32
    %c0_i32_1 = arith.constant 0 : i32
    return %c0_i32, %c0_i32_0 : i32, i32
  }
  func.func @transform_5(%arg0: i32) -> (i32, i32) {
    %c0_i32 = arith.constant 0 : i32
    %c0_i32_0 = arith.constant 0 : i32
    %c0_i32_1 = arith.constant 0 : i32
    return %c0_i32, %c0_i32_0 : i32, i32
  }
  func.func @transform_6(%arg0: i32) -> (i32, i32) {
    %c0_i32 = arith.constant 0 : i32
    %c0_i32_0 = arith.constant 0 : i32
    %c0_i32_1 = arith.constant 0 : i32
    return %c0_i32, %c0_i32_0 : i32, i32
  }
  func.func @transform_7(%arg0: i32) -> (i32, i32) {
    %c0_i32 = arith.constant 0 : i32
    %c0_i32_0 = arith.constant 0 : i32
    %c0_i32_1 = arith.constant 0 : i32
    return %c0_i32, %c0_i32_0 : i32, i32
  }
  func.func @transform_8(%arg0: i32) -> (i32, i32) {
    %c0_i32 = arith.constant 0 : i32
    %c0_i32_0 = arith.constant 0 : i32
    %c0_i32_1 = arith.constant 0 : i32
    return %c0_i32, %c0_i32_0 : i32, i32
  }
  func.func @transform_9(%arg0: i32) -> (i32, i32) {
    %c0_i32 = arith.constant 0 : i32
    %c0_i32_0 = arith.constant 0 : i32
    %c0_i32_1 = arith.constant 0 : i32
    return %c0_i32, %c0_i32_0 : i32, i32
  }
  func.func @transform_10(%arg0: i32) -> (i32, i32) {
    %c0_i32 = arith.constant 0 : i32
    %c0_i32_0 = arith.constant 0 : i32
    %c0_i32_1 = arith.constant 0 : i32
    return %c0_i32, %c0_i32_0 : i32, i32
  }
  func.func @transform_11(%arg0: i32) -> (i32, i32) {
    %c0_i32 = arith.constant 0 : i32
    %c0_i32_0 = arith.constant 0 : i32
    %c0_i32_1 = arith.constant 0 : i32
    return %c0_i32, %c0_i32_0 : i32, i32
  }
  func.func @transform_12(%arg0: i32) -> (i32, i32) {
    %c0_i32 = arith.constant 0 : i32
    %c0_i32_0 = arith.constant 0 : i32
    %c0_i32_1 = arith.constant 0 : i32
    return %c0_i32, %c0_i32_0 : i32, i32
  }
  func.func @transform_13(%arg0: i32) -> (i32, i32) {
    %c0_i32 = arith.constant 0 : i32
    %c0_i32_0 = arith.constant 0 : i32
    %c0_i32_1 = arith.constant 0 : i32
    return %c0_i32, %c0_i32_0 : i32, i32
  }
  func.func @transform_14(%arg0: i32) -> (i32, i32) {
    %c0_i32 = arith.constant 0 : i32
    %c0_i32_0 = arith.constant 0 : i32
    %c0_i32_1 = arith.constant 0 : i32
    return %c0_i32, %c0_i32_0 : i32, i32
  }
  func.func @transform_15(%arg0: i32) -> (i32, i32) {
    %c0_i32 = arith.constant 0 : i32
    %c0_i32_0 = arith.constant 0 : i32
    return %c0_i32, %arg0 : i32, i32
  }
}

</mosaic_0001>

<llo_original>
// kernel: _forward_impl.1
$region0: #{_forward_impl.1}
  #allocation0 [shape = 'u32[]', space=smem, size = 0x4, offset = 0x4, fixed_abs, tag = 'smem constant byte address 0x4 - core index']
  #allocation1 [shape = 'u32[144,128]{1,0:T(1,128)}', space=vmem, size = 0x12000, scoped, tag = 'internal scratch']
  %s0 = inlined_call_operand.vmem [shape: f32[32,128], index: 0, kind: input, shape index: {}]
  %s1 = inlined_call_operand.vmem [shape: f32[64,32], index: 1, kind: input, shape index: {}]
  %s2 = inlined_call_operand.vmem [shape: f32[64,1], index: 2, kind: input, shape index: {}]
  %s3 = inlined_call_operand.vmem [shape: f32[64,64], index: 3, kind: input, shape index: {}]
  %s4 = inlined_call_operand.vmem [shape: f32[64,1], index: 4, kind: input, shape index: {}]
  %s5 = inlined_call_operand.vmem [shape: f32[48,64], index: 5, kind: input, shape index: {}]
  %s6 = inlined_call_operand.vmem [shape: f32[48,1], index: 6, kind: input, shape index: {}]
  %s7 = inlined_call_operand.vmem [shape: f32[32,48], index: 7, kind: input, shape index: {}]
  %s8 = inlined_call_operand.vmem [shape: f32[32,1], index: 8, kind: input, shape index: {}]
  %s9 = inlined_call_operand.vmem [shape: f32[16,32], index: 9, kind: input, shape index: {}]
  %s10 = inlined_call_operand.vmem [shape: f32[16,1], index: 10, kind: input, shape index: {}]
  %s11 = inlined_call_operand.vmem [shape: f32[16,16], index: 11, kind: input, shape index: {}]
  %s12 = inlined_call_operand.vmem [shape: f32[16,1], index: 12, kind: input, shape index: {}]
  %s13 = inlined_call_operand.vmem [shape: f32[4,16], index: 13, kind: input, shape index: {}]
  %s14 = inlined_call_operand.vmem [shape: f32[4,1], index: 14, kind: input, shape index: {}]
  %s15 = inlined_call_operand.vmem [shape: f32[4,128], index: 15, kind: output, shape index: {}]
  %s16 = sld [smem:[#allocation0]]
  $region70: #{_forward_impl.1} parent=0
    _
  %s18 = ssub.s32 1, %s16
  %s19 = scalar_select 0, %s18, %s16
  // Predicated region
  $region2: #{_forward_impl.1} parent=0 // pred_check
    _
  $region3: #{_forward_impl.1} parent=0 // pred_check_branch
    %21 = sbr.rel (0) target = $region5
  $region4: #{_forward_impl.1} parent=0 // pred_region
    _
  $region5: #{_forward_impl.1} parent=0 // pred_fallthru
    _
  // Predicated region
  $region6: #{_forward_impl.1} parent=0 // pred_check
    _
  $region7: #{_forward_impl.1} parent=0 // pred_check_branch
    %23 = sbr.rel (0) target = $region9
  $region8: #{_forward_impl.1} parent=0 // pred_region
    _
  $region9: #{_forward_impl.1} parent=0 // pred_fallthru
    _
  // Predicated region
  $region10: #{_forward_impl.1} parent=0 // pred_check
    _
  $region11: #{_forward_impl.1} parent=0 // pred_check_branch
    %25 = sbr.rel (0) target = $region13
  $region12: #{_forward_impl.1} parent=0 // pred_region
    _
  $region13: #{_forward_impl.1} parent=0 // pred_fallthru
    _
  // Predicated region
  $region14: #{_forward_impl.1} parent=0 // pred_check
    _
  $region15: #{_forward_impl.1} parent=0 // pred_check_branch
    %27 = sbr.rel (0) target = $region17
  $region16: #{_forward_impl.1} parent=0 // pred_region
    _
  $region17: #{_forward_impl.1} parent=0 // pred_fallthru
    _
  // Predicated region
  $region18: #{_forward_impl.1} parent=0 // pred_check
    _
  $region19: #{_forward_impl.1} parent=0 // pred_check_branch
    %29 = sbr.rel (0) target = $region21
  $region20: #{_forward_impl.1} parent=0 // pred_region
    _
  $region21: #{_forward_impl.1} parent=0 // pred_fallthru
    _
  // Predicated region
  $region22: #{_forward_impl.1} parent=0 // pred_check
    _
  $region23: #{_forward_impl.1} parent=0 // pred_check_branch
    %31 = sbr.rel (0) target = $region25
  $region24: #{_forward_impl.1} parent=0 // pred_region
    _
  $region25: #{_forward_impl.1} parent=0 // pred_fallthru
    _
  // Predicated region
  $region26: #{_forward_impl.1} parent=0 // pred_check
    _
  $region27: #{_forward_impl.1} parent=0 // pred_check_branch
    %33 = sbr.rel (0) target = $region29
  $region28: #{_forward_impl.1} parent=0 // pred_region
    _
  $region29: #{_forward_impl.1} parent=0 // pred_fallthru
    _
  // Predicated region
  $region30: #{_forward_impl.1} parent=0 // pred_check
    _
  $region31: #{_forward_impl.1} parent=0 // pred_check_branch
    %35 = sbr.rel (0) target = $region33
  $region32: #{_forward_impl.1} parent=0 // pred_region
    _
  $region33: #{_forward_impl.1} parent=0 // pred_fallthru
    _
  // Predicated region
  $region34: #{_forward_impl.1} parent=0 // pred_check
    _
  $region35: #{_forward_impl.1} parent=0 // pred_check_branch
    %37 = sbr.rel (0) target = $region37
  $region36: #{_forward_impl.1} parent=0 // pred_region
    _
  $region37: #{_forward_impl.1} parent=0 // pred_fallthru
    _
  // Predicated region
  $region38: #{_forward_impl.1} parent=0 // pred_check
    _
  $region39: #{_forward_impl.1} parent=0 // pred_check_branch
    %39 = sbr.rel (0) target = $region41
  $region40: #{_forward_impl.1} parent=0 // pred_region
    _
  $region41: #{_forward_impl.1} parent=0 // pred_fallthru
    _
  // Predicated region
  $region42: #{_forward_impl.1} parent=0 // pred_check
    _
  $region43: #{_forward_impl.1} parent=0 // pred_check_branch
    %41 = sbr.rel (0) target = $region45
  $region44: #{_forward_impl.1} parent=0 // pred_region
    _
  $region45: #{_forward_impl.1} parent=0 // pred_fallthru
    _
  // Predicated region
  $region46: #{_forward_impl.1} parent=0 // pred_check
    _
  $region47: #{_forward_impl.1} parent=0 // pred_check_branch
    %43 = sbr.rel (0) target = $region49
  $region48: #{_forward_impl.1} parent=0 // pred_region
    _
  $region49: #{_forward_impl.1} parent=0 // pred_fallthru
    _
  // Predicated region
  $region50: #{_forward_impl.1} parent=0 // pred_check
    _
  $region51: #{_forward_impl.1} parent=0 // pred_check_branch
    %45 = sbr.rel (0) target = $region53
  $region52: #{_forward_impl.1} parent=0 // pred_region
    _
  $region53: #{_forward_impl.1} parent=0 // pred_fallthru
    _
  // Predicated region
  $region54: #{_forward_impl.1} parent=0 // pred_check
    _
  $region55: #{_forward_impl.1} parent=0 // pred_check_branch
    %47 = sbr.rel (0) target = $region57
  $region56: #{_forward_impl.1} parent=0 // pred_region
    _
  $region57: #{_forward_impl.1} parent=0 // pred_fallthru
    _
  // Predicated region
  $region58: #{_forward_impl.1} parent=0 // pred_check
    _
  $region59: #{_forward_impl.1} parent=0 // pred_check_branch
    %49 = sbr.rel (0) target = $region61
  $region60: #{_forward_impl.1} parent=0 // pred_region
    _
  $region61: #{_forward_impl.1} parent=0 // pred_fallthru
    _
  %v50 = vld [vmem:[%s0] sm:$0xff]
  %v51 = vld [vmem:[%s0 + $0x8] sm:$0xff]
  %v52 = vld [vmem:[%s0 + $0x10] sm:$0xff]
  %v53 = vld [vmem:[%s0 + $0x18] sm:$0xff]
  %v54 = vadd.f32 %v50, %v51
  %v55 = vadd.f32 %v54, %v52
  %v56 = vadd.f32 %v55, %v53
  %v57 = vrot.slane %v56, 4
  %v58 = vadd.f32 %v56, %v57
  %v59 = vrot.slane %v58, 2
  %v60 = vadd.f32 %v58, %v59
  %v61 = vrot.slane %v60, 1
  %v62 = vadd.f32 %v60, %v61
  %v63 = vrcp.pop 32.0
  %v64 = vmul.f32 %v62, %v63
  %v65 = vsub.f32 %v50, %v64
  %v66 = vsub.f32 %v51, %v64
  %v67 = vsub.f32 %v52, %v64
  %v68 = vsub.f32 %v53, %v64
  %v69 = vmul.f32 %v65, %v65
  %v70 = vmul.f32 %v66, %v66
  %v71 = vmul.f32 %v67, %v67
  %v72 = vmul.f32 %v68, %v68
  %v73 = vadd.f32 %v69, %v70
  %v74 = vadd.f32 %v73, %v71
  %v75 = vadd.f32 %v74, %v72
  %v76 = vrot.slane %v75, 4
  %v77 = vadd.f32 %v75, %v76
  %v78 = vrot.slane %v77, 2
  %v79 = vadd.f32 %v77, %v78
  %v80 = vrot.slane %v79, 1
  %v81 = vadd.f32 %v79, %v80
  %v82 = vmul.f32 %v81, %v63
  %v83 = vadd.f32 %v82, 1e-05
  %v84 = vrsqrt.pop %v83
  %v85 = vmul.f32 %v65, %v84
  %v86 = vmul.f32 %v66, %v84
  %v87 = vmul.f32 %v67, %v84
  %v88 = vmul.f32 %v68, %v84
  %v89 = vld [vmem:[%s1] sm:$0xff]
  %v90 = vld [vmem:[%s1 + $0x8] sm:$0xff]
  %v91 = vld [vmem:[%s1 + $0x10] sm:$0xff]
  %v92 = vld [vmem:[%s1 + $0x18] sm:$0xff]
  %v93 = vld [vmem:[%s1 + $0x20] sm:$0xff]
  %v94 = vld [vmem:[%s1 + $0x28] sm:$0xff]
  %v95 = vld [vmem:[%s1 + $0x30] sm:$0xff]
  %v96 = vld [vmem:[%s1 + $0x38] sm:$0xff]
  %v97 = vld [vmem:[%s2] sm:$0xff]
  %v98 = vld [vmem:[%s2 + $0x8] sm:$0xff]
  %v99 = vld [vmem:[%s2 + $0x10] sm:$0xff]
  %v100 = vld [vmem:[%s2 + $0x18] sm:$0xff]
  %v101 = vld [vmem:[%s2 + $0x20] sm:$0xff]
  %v102 = vld [vmem:[%s2 + $0x28] sm:$0xff]
  %v103 = vld [vmem:[%s2 + $0x30] sm:$0xff]
  %v104 = vld [vmem:[%s2 + $0x38] sm:$0xff]
  %106 = vset.pattern.permute.xlu0 0
  %107 = vperm.xlu0 %106, %v97
  %v108 = vpop.permute.xlu0 %107
  %111 = vset.pattern.permute.xlu0 0
  %112 = vperm.xlu0 %111, %v98
  %v113 = vpop.permute.xlu0 %112
  %116 = vset.pattern.permute.xlu0 0
  %117 = vperm.xlu0 %116, %v99
  %v118 = vpop.permute.xlu0 %117
  %121 = vset.pattern.permute.xlu0 0
  %122 = vperm.xlu0 %121, %v100
  %v123 = vpop.permute.xlu0 %122
  %126 = vset.pattern.permute.xlu0 0
  %127 = vperm.xlu0 %126, %v101
  %v128 = vpop.permute.xlu0 %127
  %131 = vset.pattern.permute.xlu0 0
  %132 = vperm.xlu0 %131, %v102
  %v133 = vpop.permute.xlu0 %132
  %136 = vset.pattern.permute.xlu0 0
  %137 = vperm.xlu0 %136, %v103
  %v138 = vpop.permute.xlu0 %137
  %141 = vset.pattern.permute.xlu0 0
  %142 = vperm.xlu0 %141, %v104
  %v143 = vpop.permute.xlu0 %142
  %vm145 = vcmask 261120
  %v147 = vsel %vm145, %v89, 0
  %v150 = vsel %vm145, %v90, 0
  %v153 = vsel %vm145, %v91, 0
  %v156 = vsel %vm145, %v92, 0
  %v159 = vsel %vm145, %v93, 0
  %v162 = vsel %vm145, %v94, 0
  %v165 = vsel %vm145, %v95, 0
  %v168 = vsel %vm145, %v96, 0
  %170 = vmatprep.subr.mxu0 0.0
  %171 = vmatpush1.msra.mxu0 0.0
  %172 = vmatprep.subr.mxu0 0.0
  %173 = vmatpush1.msra.mxu0 0.0
  %174 = vmatprep.subr.mxu0 0.0
  %175 = vmatpush1.msra.mxu0 0.0
  %176 = vmatprep.subr.mxu0 0.0
  %177 = vmatpush1.msra.mxu0 0.0
  %178 = vmatprep.subr.mxu0 0.0
  %179 = vmatpush1.msra.mxu0 0.0
  %180 = vmatprep.subr.mxu0 0.0
  %181 = vmatpush1.msra.mxu0 0.0
  %182 = vmatprep.subr.mxu0 0.0
  %183 = vmatpush1.msra.mxu0 0.0
  %184 = vmatprep.subr.mxu0 0.0
  %185 = vmatpush1.msra.mxu0 0.0
  %186 = vmatprep.subr.mxu0 0.0
  %187 = vmatpush1.msra.mxu0 0.0
  %188 = vmatprep.subr.mxu0 0.0
  %189 = vmatpush1.msra.mxu0 0.0
  %190 = vmatprep.subr.mxu0 0.0
  %191 = vmatpush1.msra.mxu0 0.0
  %192 = vmatprep.subr.mxu0 0.0
  %193 = vmatpush1.msra.mxu0 0.0
  %194 = vmatprep.subr.mxu0 0.0
  %195 = vmatpush1.msra.mxu0 %v88
  %196 = vmatprep.subr.mxu0 0.0
  %197 = vmatpush1.msra.mxu0 %v87
  %198 = vmatprep.subr.mxu0 0.0
  %199 = vmatpush1.msra.mxu0 %v86
  %200 = vmatprep.subr.mxu0 0.0
  %201 = vmatpush1.msra.mxu0 %v85
  %202 = vmatprep.subr.mxu0 0.0
  %203 = vmatpush2.msra.mxu0 0.0
  %204 = vmatprep.subr.mxu0 0.0
  %205 = vmatpush2.msra.mxu0 0.0
  %206 = vmatprep.subr.mxu0 0.0
  %207 = vmatpush2.msra.mxu0 0.0
  %208 = vmatprep.subr.mxu0 0.0
  %209 = vmatpush2.msra.mxu0 0.0
  %210 = vmatprep.subr.mxu0 0.0
  %211 = vmatpush2.msra.mxu0 0.0
  %212 = vmatprep.subr.mxu0 0.0
  %213 = vmatpush2.msra.mxu0 0.0
  %214 = vmatprep.subr.mxu0 0.0
  %215 = vmatpush2.msra.mxu0 0.0
  %216 = vmatprep.subr.mxu0 0.0
  %217 = vmatpush2.msra.mxu0 0.0
  %218 = vmatprep.subr.mxu0 0.0
  %219 = vmatpush2.msra.mxu0 0.0
  %220 = vmatprep.subr.mxu0 0.0
  %221 = vmatpush2.msra.mxu0 0.0
  %222 = vmatprep.subr.mxu0 0.0
  %223 = vmatpush2.msra.mxu0 0.0
  %224 = vmatprep.subr.mxu0 0.0
  %225 = vmatpush2.msra.mxu0 0.0
  %226 = vmatprep.subr.mxu0 0.0
  %227 = vmatpush2.msra.mxu0 0.0
  %228 = vmatprep.subr.mxu0 0.0
  %229 = vmatpush2.msra.mxu0 0.0
  %230 = vmatprep.subr.mxu0 0.0
  %231 = vmatpush2.msra.mxu0 0.0
  %232 = vmatprep.subr.mxu0 0.0
  %233 = vmatpush2.msra.mxu0 0.0
  %234 = vmatprep.mubr.f32.mxu0 0.0
  %235 = vmatmul.mubr.f32.gmra.mxu0 %v147
  %v236 = vpop.f32.mrf.mxu0
  %v237 = vadd.f32 %v108, %v236
  %v238 = vpop.f32.mrf.mxu0
  %239 = vmatprep.mubr.f32.mxu0 0.0
  %240 = vmatmul.mubr.f32.gmra.mxu0 %v150
  %v241 = vpop.f32.mrf.mxu0
  %v242 = vadd.f32 %v113, %v241
  %v243 = vpop.f32.mrf.mxu0
  %244 = vmatprep.mubr.f32.mxu0 0.0
  %245 = vmatmul.mubr.f32.gmra.mxu0 %v153
  %v246 = vpop.f32.mrf.mxu0
  %v247 = vadd.f32 %v118, %v246
  %v248 = vpop.f32.mrf.mxu0
  %249 = vmatprep.mubr.f32.mxu0 0.0
  %250 = vmatmul.mubr.f32.gmra.mxu0 %v156
  %v251 = vpop.f32.mrf.mxu0
  %v252 = vadd.f32 %v123, %v251
  %v253 = vpop.f32.mrf.mxu0
  %254 = vmatprep.mubr.f32.mxu0 0.0
  %255 = vmatmul.mubr.f32.gmra.mxu0 %v159
  %v256 = vpop.f32.mrf.mxu0
  %v257 = vadd.f32 %v128, %v256
  %v258 = vpop.f32.mrf.mxu0
  %259 = vmatprep.mubr.f32.mxu0 0.0
  %260 = vmatmul.mubr.f32.gmra.mxu0 %v162
  %v261 = vpop.f32.mrf.mxu0
  %v262 = vadd.f32 %v133, %v261
  %v263 = vpop.f32.mrf.mxu0
  %264 = vmatprep.mubr.f32.mxu0 0.0
  %265 = vmatmul.mubr.f32.gmra.mxu0 %v165
  %v266 = vpop.f32.mrf.mxu0
  %v267 = vadd.f32 %v138, %v266
  %v268 = vpop.f32.mrf.mxu0
  %269 = vmatprep.mubr.f32.mxu0 0.0
  %270 = vmatmul.mubr.f32.gmra.mxu0 %v168
  %v271 = vpop.f32.mrf.mxu0
  %v272 = vadd.f32 %v143, %v271
  %v273 = vpop.f32.mrf.mxu0
  %274 = vdwg.mxu0
  %v275 = vtanh.pop %v237
  %v276 = vtanh.pop %v242
  %v277 = vtanh.pop %v247
  %v278 = vtanh.pop %v252
  %v279 = vtanh.pop %v257
  %v280 = vtanh.pop %v262
  %v281 = vtanh.pop %v267
  %v282 = vtanh.pop %v272
  %v283 = vld [vmem:[%s3] sm:$0xff]
  %v284 = vld [vmem:[%s3 + $0x8] sm:$0xff]
  %v285 = vld [vmem:[%s3 + $0x10] sm:$0xff]
  %v286 = vld [vmem:[%s3 + $0x18] sm:$0xff]
  %v287 = vld [vmem:[%s3 + $0x20] sm:$0xff]
  %v288 = vld [vmem:[%s3 + $0x28] sm:$0xff]
  %v289 = vld [vmem:[%s3 + $0x30] sm:$0xff]
  %v290 = vld [vmem:[%s3 + $0x38] sm:$0xff]
  %v291 = vld [vmem:[%s4] sm:$0xff]
  %v292 = vld [vmem:[%s4 + $0x8] sm:$0xff]
  %v293 = vld [vmem:[%s4 + $0x10] sm:$0xff]
  %v294 = vld [vmem:[%s4 + $0x18] sm:$0xff]
  %v295 = vld [vmem:[%s4 + $0x20] sm:$0xff]
  %v296 = vld [vmem:[%s4 + $0x28] sm:$0xff]
  %v297 = vld [vmem:[%s4 + $0x30] sm:$0xff]
  %v298 = vld [vmem:[%s4 + $0x38] sm:$0xff]
  %300 = vset.pattern.permute.xlu0 0
  %301 = vperm.xlu0 %300, %v291
  %v302 = vpop.permute.xlu0 %301
  %305 = vset.pattern.permute.xlu0 0
  %306 = vperm.xlu0 %305, %v292
  %v307 = vpop.permute.xlu0 %306
  %310 = vset.pattern.permute.xlu0 0
  %311 = vperm.xlu0 %310, %v293
  %v312 = vpop.permute.xlu0 %311
  %315 = vset.pattern.permute.xlu0 0
  %316 = vperm.xlu0 %315, %v294
  %v317 = vpop.permute.xlu0 %316
  %320 = vset.pattern.permute.xlu0 0
  %321 = vperm.xlu0 %320, %v295
  %v322 = vpop.permute.xlu0 %321
  %325 = vset.pattern.permute.xlu0 0
  %326 = vperm.xlu0 %325, %v296
  %v327 = vpop.permute.xlu0 %326
  %330 = vset.pattern.permute.xlu0 0
  %331 = vperm.xlu0 %330, %v297
  %v332 = vpop.permute.xlu0 %331
  %335 = vset.pattern.permute.xlu0 0
  %336 = vperm.xlu0 %335, %v298
  %v337 = vpop.permute.xlu0 %336
  %vm339 = vcmask 523264
  %v341 = vsel %vm339, %v283, 0
  %v344 = vsel %vm339, %v284, 0
  %v347 = vsel %vm339, %v285, 0
  %v350 = vsel %vm339, %v286, 0
  %v353 = vsel %vm339, %v287, 0
  %v356 = vsel %vm339, %v288, 0
  %v359 = vsel %vm339, %v289, 0
  %v362 = vsel %vm339, %v290, 0
  %364 = vmatprep.subr.mxu0 0.0
  %365 = vmatpush1.msra.mxu0 0.0
  %366 = vmatprep.subr.mxu0 0.0
  %367 = vmatpush1.msra.mxu0 0.0
  %368 = vmatprep.subr.mxu0 0.0
  %369 = vmatpush1.msra.mxu0 0.0
  %370 = vmatprep.subr.mxu0 0.0
  %371 = vmatpush1.msra.mxu0 0.0
  %372 = vmatprep.subr.mxu0 0.0
  %373 = vmatpush1.msra.mxu0 0.0
  %374 = vmatprep.subr.mxu0 0.0
  %375 = vmatpush1.msra.mxu0 0.0
  %376 = vmatprep.subr.mxu0 0.0
  %377 = vmatpush1.msra.mxu0 0.0
  %378 = vmatprep.subr.mxu0 0.0
  %379 = vmatpush1.msra.mxu0 0.0
  %380 = vmatprep.subr.mxu0 0.0
  %381 = vmatpush1.msra.mxu0 %v282
  %382 = vmatprep.subr.mxu0 0.0
  %383 = vmatpush1.msra.mxu0 %v281
  %384 = vmatprep.subr.mxu0 0.0
  %385 = vmatpush1.msra.mxu0 %v280
  %386 = vmatprep.subr.mxu0 0.0
  %387 = vmatpush1.msra.mxu0 %v279
  %388 = vmatprep.subr.mxu0 0.0
  %389 = vmatpush1.msra.mxu0 %v278
  %390 = vmatprep.subr.mxu0 0.0
  %391 = vmatpush1.msra.mxu0 %v277
  %392 = vmatprep.subr.mxu0 0.0
  %393 = vmatpush1.msra.mxu0 %v276
  %394 = vmatprep.subr.mxu0 0.0
  %395 = vmatpush1.msra.mxu0 %v275
  %396 = vmatprep.subr.mxu0 0.0
  %397 = vmatpush2.msra.mxu0 0.0
  %398 = vmatprep.subr.mxu0 0.0
  %399 = vmatpush2.msra.mxu0 0.0
  %400 = vmatprep.subr.mxu0 0.0
  %401 = vmatpush2.msra.mxu0 0.0
  %402 = vmatprep.subr.mxu0 0.0
  %403 = vmatpush2.msra.mxu0 0.0
  %404 = vmatprep.subr.mxu0 0.0
  %405 = vmatpush2.msra.mxu0 0.0
  %406 = vmatprep.subr.mxu0 0.0
  %407 = vmatpush2.msra.mxu0 0.0
  %408 = vmatprep.subr.mxu0 0.0
  %409 = vmatpush2.msra.mxu0 0.0
  %410 = vmatprep.subr.mxu0 0.0
  %411 = vmatpush2.msra.mxu0 0.0
  %412 = vmatprep.subr.mxu0 0.0
  %413 = vmatpush2.msra.mxu0 0.0
  %414 = vmatprep.subr.mxu0 0.0
  %415 = vmatpush2.msra.mxu0 0.0
  %416 = vmatprep.subr.mxu0 0.0
  %417 = vmatpush2.msra.mxu0 0.0
  %418 = vmatprep.subr.mxu0 0.0
  %419 = vmatpush2.msra.mxu0 0.0
  %420 = vmatprep.subr.mxu0 0.0
  %421 = vmatpush2.msra.mxu0 0.0
  %422 = vmatprep.subr.mxu0 0.0
  %423 = vmatpush2.msra.mxu0 0.0
  %424 = vmatprep.subr.mxu0 0.0
  %425 = vmatpush2.msra.mxu0 0.0
  %426 = vmatprep.subr.mxu0 0.0
  %427 = vmatpush2.msra.mxu0 0.0
  %428 = vmatprep.mubr.f32.mxu0 0.0
  %429 = vmatmul.mubr.f32.gmra.mxu0 %v341
  %v430 = vpop.f32.mrf.mxu0
  %v431 = vadd.f32 %v302, %v430
  %v432 = vpop.f32.mrf.mxu0
  %433 = vmatprep.mubr.f32.mxu0 0.0
  %434 = vmatmul.mubr.f32.gmra.mxu0 %v344
  %v435 = vpop.f32.mrf.mxu0
  %v436 = vadd.f32 %v307, %v435
  %v437 = vpop.f32.mrf.mxu0
  %438 = vmatprep.mubr.f32.mxu0 0.0
  %439 = vmatmul.mubr.f32.gmra.mxu0 %v347
  %v440 = vpop.f32.mrf.mxu0
  %v441 = vadd.f32 %v312, %v440
  %v442 = vpop.f32.mrf.mxu0
  %443 = vmatprep.mubr.f32.mxu0 0.0
  %444 = vmatmul.mubr.f32.gmra.mxu0 %v350
  %v445 = vpop.f32.mrf.mxu0
  %v446 = vadd.f32 %v317, %v445
  %v447 = vpop.f32.mrf.mxu0
  %448 = vmatprep.mubr.f32.mxu0 0.0
  %449 = vmatmul.mubr.f32.gmra.mxu0 %v353
  %v450 = vpop.f32.mrf.mxu0
  %v451 = vadd.f32 %v322, %v450
  %v452 = vpop.f32.mrf.mxu0
  %453 = vmatprep.mubr.f32.mxu0 0.0
  %454 = vmatmul.mubr.f32.gmra.mxu0 %v356
  %v455 = vpop.f32.mrf.mxu0
  %v456 = vadd.f32 %v327, %v455
  %v457 = vpop.f32.mrf.mxu0
  %458 = vmatprep.mubr.f32.mxu0 0.0
  %459 = vmatmul.mubr.f32.gmra.mxu0 %v359
  %v460 = vpop.f32.mrf.mxu0
  %v461 = vadd.f32 %v332, %v460
  %v462 = vpop.f32.mrf.mxu0
  %463 = vmatprep.mubr.f32.mxu0 0.0
  %464 = vmatmul.mubr.f32.gmra.mxu0 %v362
  %v465 = vpop.f32.mrf.mxu0
  %v466 = vadd.f32 %v337, %v465
  %v467 = vpop.f32.mrf.mxu0
  %468 = vdwg.mxu0
  %v469 = vtanh.pop %v431
  %v470 = vtanh.pop %v436
  %v471 = vtanh.pop %v441
  %v472 = vtanh.pop %v446
  %v473 = vtanh.pop %v451
  %v474 = vtanh.pop %v456
  %v475 = vtanh.pop %v461
  %v476 = vtanh.pop %v466
  %v477 = vld [vmem:[%s5] sm:$0xff]
  %v478 = vld [vmem:[%s5 + $0x8] sm:$0xff]
  %v479 = vld [vmem:[%s5 + $0x10] sm:$0xff]
  %v480 = vld [vmem:[%s5 + $0x18] sm:$0xff]
  %v481 = vld [vmem:[%s5 + $0x20] sm:$0xff]
  %v482 = vld [vmem:[%s5 + $0x28] sm:$0xff]
  %v483 = vld [vmem:[%s6] sm:$0xff]
  %v484 = vld [vmem:[%s6 + $0x8] sm:$0xff]
  %v485 = vld [vmem:[%s6 + $0x10] sm:$0xff]
  %v486 = vld [vmem:[%s6 + $0x18] sm:$0xff]
  %v487 = vld [vmem:[%s6 + $0x20] sm:$0xff]
  %v488 = vld [vmem:[%s6 + $0x28] sm:$0xff]
  %490 = vset.pattern.permute.xlu0 0
  %491 = vperm.xlu0 %490, %v483
  %v492 = vpop.permute.xlu0 %491
  %495 = vset.pattern.permute.xlu0 0
  %496 = vperm.xlu0 %495, %v484
  %v497 = vpop.permute.xlu0 %496
  %500 = vset.pattern.permute.xlu0 0
  %501 = vperm.xlu0 %500, %v485
  %v502 = vpop.permute.xlu0 %501
  %505 = vset.pattern.permute.xlu0 0
  %506 = vperm.xlu0 %505, %v486
  %v507 = vpop.permute.xlu0 %506
  %510 = vset.pattern.permute.xlu0 0
  %511 = vperm.xlu0 %510, %v487
  %v512 = vpop.permute.xlu0 %511
  %515 = vset.pattern.permute.xlu0 0
  %516 = vperm.xlu0 %515, %v488
  %v517 = vpop.permute.xlu0 %516
  %v520 = vsel %vm339, %v477, 0
  %v523 = vsel %vm339, %v478, 0
  %v526 = vsel %vm339, %v479, 0
  %v529 = vsel %vm339, %v480, 0
  %v532 = vsel %vm339, %v481, 0
  %v535 = vsel %vm339, %v482, 0
  %537 = vmatprep.subr.mxu0 0.0
  %538 = vmatpush1.msra.mxu0 0.0
  %539 = vmatprep.subr.mxu0 0.0
  %540 = vmatpush1.msra.mxu0 0.0
  %541 = vmatprep.subr.mxu0 0.0
  %542 = vmatpush1.msra.mxu0 0.0
  %543 = vmatprep.subr.mxu0 0.0
  %544 = vmatpush1.msra.mxu0 0.0
  %545 = vmatprep.subr.mxu0 0.0
  %546 = vmatpush1.msra.mxu0 0.0
  %547 = vmatprep.subr.mxu0 0.0
  %548 = vmatpush1.msra.mxu0 0.0
  %549 = vmatprep.subr.mxu0 0.0
  %550 = vmatpush1.msra.mxu0 0.0
  %551 = vmatprep.subr.mxu0 0.0
  %552 = vmatpush1.msra.mxu0 0.0
  %553 = vmatprep.subr.mxu0 0.0
  %554 = vmatpush1.msra.mxu0 %v476
  %555 = vmatprep.subr.mxu0 0.0
  %556 = vmatpush1.msra.mxu0 %v475
  %557 = vmatprep.subr.mxu0 0.0
  %558 = vmatpush1.msra.mxu0 %v474
  %559 = vmatprep.subr.mxu0 0.0
  %560 = vmatpush1.msra.mxu0 %v473
  %561 = vmatprep.subr.mxu0 0.0
  %562 = vmatpush1.msra.mxu0 %v472
  %563 = vmatprep.subr.mxu0 0.0
  %564 = vmatpush1.msra.mxu0 %v471
  %565 = vmatprep.subr.mxu0 0.0
  %566 = vmatpush1.msra.mxu0 %v470
  %567 = vmatprep.subr.mxu0 0.0
  %568 = vmatpush1.msra.mxu0 %v469
  %569 = vmatprep.subr.mxu0 0.0
  %570 = vmatpush2.msra.mxu0 0.0
  %571 = vmatprep.subr.mxu0 0.0
  %572 = vmatpush2.msra.mxu0 0.0
  %573 = vmatprep.subr.mxu0 0.0
  %574 = vmatpush2.msra.mxu0 0.0
  %575 = vmatprep.subr.mxu0 0.0
  %576 = vmatpush2.msra.mxu0 0.0
  %577 = vmatprep.subr.mxu0 0.0
  %578 = vmatpush2.msra.mxu0 0.0
  %579 = vmatprep.subr.mxu0 0.0
  %580 = vmatpush2.msra.mxu0 0.0
  %581 = vmatprep.subr.mxu0 0.0
  %582 = vmatpush2.msra.mxu0 0.0
  %583 = vmatprep.subr.mxu0 0.0
  %584 = vmatpush2.msra.mxu0 0.0
  %585 = vmatprep.subr.mxu0 0.0
  %586 = vmatpush2.msra.mxu0 0.0
  %587 = vmatprep.subr.mxu0 0.0
  %588 = vmatpush2.msra.mxu0 0.0
  %589 = vmatprep.subr.mxu0 0.0
  %590 = vmatpush2.msra.mxu0 0.0
  %591 = vmatprep.subr.mxu0 0.0
  %592 = vmatpush2.msra.mxu0 0.0
  %593 = vmatprep.subr.mxu0 0.0
  %594 = vmatpush2.msra.mxu0 0.0
  %595 = vmatprep.subr.mxu0 0.0
  %596 = vmatpush2.msra.mxu0 0.0
  %597 = vmatprep.subr.mxu0 0.0
  %598 = vmatpush2.msra.mxu0 0.0
  %599 = vmatprep.subr.mxu0 0.0
  %600 = vmatpush2.msra.mxu0 0.0
  %601 = vmatprep.mubr.f32.mxu0 0.0
  %602 = vmatmul.mubr.f32.gmra.mxu0 %v520
  %v603 = vpop.f32.mrf.mxu0
  %v604 = vadd.f32 %v492, %v603
  %v605 = vpop.f32.mrf.mxu0
  %606 = vmatprep.mubr.f32.mxu0 0.0
  %607 = vmatmul.mubr.f32.gmra.mxu0 %v523
  %v608 = vpop.f32.mrf.mxu0
  %v609 = vadd.f32 %v497, %v608
  %v610 = vpop.f32.mrf.mxu0
  %611 = vmatprep.mubr.f32.mxu0 0.0
  %612 = vmatmul.mubr.f32.gmra.mxu0 %v526
  %v613 = vpop.f32.mrf.mxu0
  %v614 = vadd.f32 %v502, %v613
  %v615 = vpop.f32.mrf.mxu0
  %616 = vmatprep.mubr.f32.mxu0 0.0
  %617 = vmatmul.mubr.f32.gmra.mxu0 %v529
  %v618 = vpop.f32.mrf.mxu0
  %v619 = vadd.f32 %v507, %v618
  %v620 = vpop.f32.mrf.mxu0
  %621 = vmatprep.mubr.f32.mxu0 0.0
  %622 = vmatmul.mubr.f32.gmra.mxu0 %v532
  %v623 = vpop.f32.mrf.mxu0
  %v624 = vadd.f32 %v512, %v623
  %v625 = vpop.f32.mrf.mxu0
  %626 = vmatprep.mubr.f32.mxu0 0.0
  %627 = vmatmul.mubr.f32.gmra.mxu0 %v535
  %v628 = vpop.f32.mrf.mxu0
  %v629 = vadd.f32 %v517, %v628
  %v630 = vpop.f32.mrf.mxu0
  %631 = vdwg.mxu0
  %v632 = vtanh.pop %v604
  %v633 = vtanh.pop %v609
  %v634 = vtanh.pop %v614
  %v635 = vtanh.pop %v619
  %v636 = vtanh.pop %v624
  %v637 = vtanh.pop %v629
  %v638 = vld [vmem:[%s7] sm:$0xff]
  %v639 = vld [vmem:[%s7 + $0x8] sm:$0xff]
  %v640 = vld [vmem:[%s7 + $0x10] sm:$0xff]
  %v641 = vld [vmem:[%s7 + $0x18] sm:$0xff]
  %v642 = vld [vmem:[%s8] sm:$0xff]
  %v643 = vld [vmem:[%s8 + $0x8] sm:$0xff]
  %v644 = vld [vmem:[%s8 + $0x10] sm:$0xff]
  %v645 = vld [vmem:[%s8 + $0x18] sm:$0xff]
  %647 = vset.pattern.permute.xlu0 0
  %648 = vperm.xlu0 %647, %v642
  %v649 = vpop.permute.xlu0 %648
  %652 = vset.pattern.permute.xlu0 0
  %653 = vperm.xlu0 %652, %v643
  %v654 = vpop.permute.xlu0 %653
  %657 = vset.pattern.permute.xlu0 0
  %658 = vperm.xlu0 %657, %v644
  %v659 = vpop.permute.xlu0 %658
  %662 = vset.pattern.permute.xlu0 0
  %663 = vperm.xlu0 %662, %v645
  %v664 = vpop.permute.xlu0 %663
  %vm666 = vcmask 392192
  %v668 = vsel %vm666, %v638, 0
  %v671 = vsel %vm666, %v639, 0
  %v674 = vsel %vm666, %v640, 0
  %v677 = vsel %vm666, %v641, 0
  %679 = vmatprep.subr.mxu0 0.0
  %680 = vmatpush1.msra.mxu0 0.0
  %681 = vmatprep.subr.mxu0 0.0
  %682 = vmatpush1.msra.mxu0 0.0
  %683 = vmatprep.subr.mxu0 0.0
  %684 = vmatpush1.msra.mxu0 0.0
  %685 = vmatprep.subr.mxu0 0.0
  %686 = vmatpush1.msra.mxu0 0.0
  %687 = vmatprep.subr.mxu0 0.0
  %688 = vmatpush1.msra.mxu0 0.0
  %689 = vmatprep.subr.mxu0 0.0
  %690 = vmatpush1.msra.mxu0 0.0
  %691 = vmatprep.subr.mxu0 0.0
  %692 = vmatpush1.msra.mxu0 0.0
  %693 = vmatprep.subr.mxu0 0.0
  %694 = vmatpush1.msra.mxu0 0.0
  %695 = vmatprep.subr.mxu0 0.0
  %696 = vmatpush1.msra.mxu0 0.0
  %697 = vmatprep.subr.mxu0 0.0
  %698 = vmatpush1.msra.mxu0 0.0
  %699 = vmatprep.subr.mxu0 0.0
  %700 = vmatpush1.msra.mxu0 %v637
  %701 = vmatprep.subr.mxu0 0.0
  %702 = vmatpush1.msra.mxu0 %v636
  %703 = vmatprep.subr.mxu0 0.0
  %704 = vmatpush1.msra.mxu0 %v635
  %705 = vmatprep.subr.mxu0 0.0
  %706 = vmatpush1.msra.mxu0 %v634
  %707 = vmatprep.subr.mxu0 0.0
  %708 = vmatpush1.msra.mxu0 %v633
  %709 = vmatprep.subr.mxu0 0.0
  %710 = vmatpush1.msra.mxu0 %v632
  %711 = vmatprep.subr.mxu0 0.0
  %712 = vmatpush2.msra.mxu0 0.0
  %713 = vmatprep.subr.mxu0 0.0
  %714 = vmatpush2.msra.mxu0 0.0
  %715 = vmatprep.subr.mxu0 0.0
  %716 = vmatpush2.msra.mxu0 0.0
  %717 = vmatprep.subr.mxu0 0.0
  %718 = vmatpush2.msra.mxu0 0.0
  %719 = vmatprep.subr.mxu0 0.0
  %720 = vmatpush2.msra.mxu0 0.0
  %721 = vmatprep.subr.mxu0 0.0
  %722 = vmatpush2.msra.mxu0 0.0
  %723 = vmatprep.subr.mxu0 0.0
  %724 = vmatpush2.msra.mxu0 0.0
  %725 = vmatprep.subr.mxu0 0.0
  %726 = vmatpush2.msra.mxu0 0.0
  %727 = vmatprep.subr.mxu0 0.0
  %728 = vmatpush2.msra.mxu0 0.0
  %729 = vmatprep.subr.mxu0 0.0
  %730 = vmatpush2.msra.mxu0 0.0
  %731 = vmatprep.subr.mxu0 0.0
  %732 = vmatpush2.msra.mxu0 0.0
  %733 = vmatprep.subr.mxu0 0.0
  %734 = vmatpush2.msra.mxu0 0.0
  %735 = vmatprep.subr.mxu0 0.0
  %736 = vmatpush2.msra.mxu0 0.0
  %737 = vmatprep.subr.mxu0 0.0
  %738 = vmatpush2.msra.mxu0 0.0
  %739 = vmatprep.subr.mxu0 0.0
  %740 = vmatpush2.msra.mxu0 0.0
  %741 = vmatprep.subr.mxu0 0.0
  %742 = vmatpush2.msra.mxu0 0.0
  %743 = vmatprep.mubr.f32.mxu0 0.0
  %744 = vmatmul.mubr.f32.gmra.mxu0 %v668
  %v745 = vpop.f32.mrf.mxu0
  %v746 = vadd.f32 %v649, %v745
  %v747 = vpop.f32.mrf.mxu0
  %748 = vmatprep.mubr.f32.mxu0 0.0
  %749 = vmatmul.mubr.f32.gmra.mxu0 %v671
  %v750 = vpop.f32.mrf.mxu0
  %v751 = vadd.f32 %v654, %v750
  %v752 = vpop.f32.mrf.mxu0
  %753 = vmatprep.mubr.f32.mxu0 0.0
  %754 = vmatmul.mubr.f32.gmra.mxu0 %v674
  %v755 = vpop.f32.mrf.mxu0
  %v756 = vadd.f32 %v659, %v755
  %v757 = vpop.f32.mrf.mxu0
  %758 = vmatprep.mubr.f32.mxu0 0.0
  %759 = vmatmul.mubr.f32.gmra.mxu0 %v677
  %v760 = vpop.f32.mrf.mxu0
  %v761 = vadd.f32 %v664, %v760
  %v762 = vpop.f32.mrf.mxu0
  %763 = vdwg.mxu0
  %v764 = vtanh.pop %v746
  %v765 = vtanh.pop %v751
  %v766 = vtanh.pop %v756
  %v767 = vtanh.pop %v761
  %v768 = vld [vmem:[%s9] sm:$0xff]
  %v769 = vld [vmem:[%s9 + $0x8] sm:$0xff]
  %v770 = vld [vmem:[%s10] sm:$0xff]
  %v771 = vld [vmem:[%s10 + $0x8] sm:$0xff]
  %773 = vset.pattern.permute.xlu0 0
  %774 = vperm.xlu0 %773, %v770
  %v775 = vpop.permute.xlu0 %774
  %778 = vset.pattern.permute.xlu0 0
  %779 = vperm.xlu0 %778, %v771
  %v780 = vpop.permute.xlu0 %779
  %v783 = vsel %vm145, %v768, 0
  %v786 = vsel %vm145, %v769, 0
  %788 = vmatprep.subr.mxu0 0.0
  %789 = vmatpush1.msra.mxu0 0.0
  %790 = vmatprep.subr.mxu0 0.0
  %791 = vmatpush1.msra.mxu0 0.0
  %792 = vmatprep.subr.mxu0 0.0
  %793 = vmatpush1.msra.mxu0 0.0
  %794 = vmatprep.subr.mxu0 0.0
  %795 = vmatpush1.msra.mxu0 0.0
  %796 = vmatprep.subr.mxu0 0.0
  %797 = vmatpush1.msra.mxu0 0.0
  %798 = vmatprep.subr.mxu0 0.0
  %799 = vmatpush1.msra.mxu0 0.0
  %800 = vmatprep.subr.mxu0 0.0
  %801 = vmatpush1.msra.mxu0 0.0
  %802 = vmatprep.subr.mxu0 0.0
  %803 = vmatpush1.msra.mxu0 0.0
  %804 = vmatprep.subr.mxu0 0.0
  %805 = vmatpush1.msra.mxu0 0.0
  %806 = vmatprep.subr.mxu0 0.0
  %807 = vmatpush1.msra.mxu0 0.0
  %808 = vmatprep.subr.mxu0 0.0
  %809 = vmatpush1.msra.mxu0 0.0
  %810 = vmatprep.subr.mxu0 0.0
  %811 = vmatpush1.msra.mxu0 0.0
  %812 = vmatprep.subr.mxu0 0.0
  %813 = vmatpush1.msra.mxu0 %v767
  %814 = vmatprep.subr.mxu0 0.0
  %815 = vmatpush1.msra.mxu0 %v766
  %816 = vmatprep.subr.mxu0 0.0
  %817 = vmatpush1.msra.mxu0 %v765
  %818 = vmatprep.subr.mxu0 0.0
  %819 = vmatpush1.msra.mxu0 %v764
  %820 = vmatprep.subr.mxu0 0.0
  %821 = vmatpush2.msra.mxu0 0.0
  %822 = vmatprep.subr.mxu0 0.0
  %823 = vmatpush2.msra.mxu0 0.0
  %824 = vmatprep.subr.mxu0 0.0
  %825 = vmatpush2.msra.mxu0 0.0
  %826 = vmatprep.subr.mxu0 0.0
  %827 = vmatpush2.msra.mxu0 0.0
  %828 = vmatprep.subr.mxu0 0.0
  %829 = vmatpush2.msra.mxu0 0.0
  %830 = vmatprep.subr.mxu0 0.0
  %831 = vmatpush2.msra.mxu0 0.0
  %832 = vmatprep.subr.mxu0 0.0
  %833 = vmatpush2.msra.mxu0 0.0
  %834 = vmatprep.subr.mxu0 0.0
  %835 = vmatpush2.msra.mxu0 0.0
  %836 = vmatprep.subr.mxu0 0.0
  %837 = vmatpush2.msra.mxu0 0.0
  %838 = vmatprep.subr.mxu0 0.0
  %839 = vmatpush2.msra.mxu0 0.0
  %840 = vmatprep.subr.mxu0 0.0
  %841 = vmatpush2.msra.mxu0 0.0
  %842 = vmatprep.subr.mxu0 0.0
  %843 = vmatpush2.msra.mxu0 0.0
  %844 = vmatprep.subr.mxu0 0.0
  %845 = vmatpush2.msra.mxu0 0.0
  %846 = vmatprep.subr.mxu0 0.0
  %847 = vmatpush2.msra.mxu0 0.0
  %848 = vmatprep.subr.mxu0 0.0
  %849 = vmatpush2.msra.mxu0 0.0
  %850 = vmatprep.subr.mxu0 0.0
  %851 = vmatpush2.msra.mxu0 0.0
  %852 = vmatprep.mubr.f32.mxu0 0.0
  %853 = vmatmul.mubr.f32.gmra.mxu0 %v783
  %v854 = vpop.f32.mrf.mxu0
  %v855 = vadd.f32 %v775, %v854
  %v856 = vpop.f32.mrf.mxu0
  %857 = vmatprep.mubr.f32.mxu0 0.0
  %858 = vmatmul.mubr.f32.gmra.mxu0 %v786
  %v859 = vpop.f32.mrf.mxu0
  %v860 = vadd.f32 %v780, %v859
  %v861 = vpop.f32.mrf.mxu0
  %862 = vdwg.mxu0
  %v863 = vtanh.pop %v855
  %v864 = vtanh.pop %v860
  %v865 = vld [vmem:[%s11] sm:$0xff]
  %v866 = vld [vmem:[%s11 + $0x8] sm:$0xff]
  %v867 = vld [vmem:[%s12] sm:$0xff]
  %v868 = vld [vmem:[%s12 + $0x8] sm:$0xff]
  %870 = vset.pattern.permute.xlu0 0
  %871 = vperm.xlu0 %870, %v867
  %v872 = vpop.permute.xlu0 %871
  %875 = vset.pattern.permute.xlu0 0
  %876 = vperm.xlu0 %875, %v868
  %v877 = vpop.permute.xlu0 %876
  %vm879 = vcmask 130048
  %v881 = vsel %vm879, %v865, 0
  %v884 = vsel %vm879, %v866, 0
  %886 = vmatprep.subr.mxu0 0.0
  %887 = vmatpush1.msra.mxu0 0.0
  %888 = vmatprep.subr.mxu0 0.0
  %889 = vmatpush1.msra.mxu0 0.0
  %890 = vmatprep.subr.mxu0 0.0
  %891 = vmatpush1.msra.mxu0 0.0
  %892 = vmatprep.subr.mxu0 0.0
  %893 = vmatpush1.msra.mxu0 0.0
  %894 = vmatprep.subr.mxu0 0.0
  %895 = vmatpush1.msra.mxu0 0.0
  %896 = vmatprep.subr.mxu0 0.0
  %897 = vmatpush1.msra.mxu0 0.0
  %898 = vmatprep.subr.mxu0 0.0
  %899 = vmatpush1.msra.mxu0 0.0
  %900 = vmatprep.subr.mxu0 0.0
  %901 = vmatpush1.msra.mxu0 0.0
  %902 = vmatprep.subr.mxu0 0.0
  %903 = vmatpush1.msra.mxu0 0.0
  %904 = vmatprep.subr.mxu0 0.0
  %905 = vmatpush1.msra.mxu0 0.0
  %906 = vmatprep.subr.mxu0 0.0
  %907 = vmatpush1.msra.mxu0 0.0
  %908 = vmatprep.subr.mxu0 0.0
  %909 = vmatpush1.msra.mxu0 0.0
  %910 = vmatprep.subr.mxu0 0.0
  %911 = vmatpush1.msra.mxu0 0.0
  %912 = vmatprep.subr.mxu0 0.0
  %913 = vmatpush1.msra.mxu0 0.0
  %914 = vmatprep.subr.mxu0 0.0
  %915 = vmatpush1.msra.mxu0 %v864
  %916 = vmatprep.subr.mxu0 0.0
  %917 = vmatpush1.msra.mxu0 %v863
  %918 = vmatprep.subr.mxu0 0.0
  %919 = vmatpush2.msra.mxu0 0.0
  %920 = vmatprep.subr.mxu0 0.0
  %921 = vmatpush2.msra.mxu0 0.0
  %922 = vmatprep.subr.mxu0 0.0
  %923 = vmatpush2.msra.mxu0 0.0
  %924 = vmatprep.subr.mxu0 0.0
  %925 = vmatpush2.msra.mxu0 0.0
  %926 = vmatprep.subr.mxu0 0.0
  %927 = vmatpush2.msra.mxu0 0.0
  %928 = vmatprep.subr.mxu0 0.0
  %929 = vmatpush2.msra.mxu0 0.0
  %930 = vmatprep.subr.mxu0 0.0
  %931 = vmatpush2.msra.mxu0 0.0
  %932 = vmatprep.subr.mxu0 0.0
  %933 = vmatpush2.msra.mxu0 0.0
  %934 = vmatprep.subr.mxu0 0.0
  %935 = vmatpush2.msra.mxu0 0.0
  %936 = vmatprep.subr.mxu0 0.0
  %937 = vmatpush2.msra.mxu0 0.0
  %938 = vmatprep.subr.mxu0 0.0
  %939 = vmatpush2.msra.mxu0 0.0
  %940 = vmatprep.subr.mxu0 0.0
  %941 = vmatpush2.msra.mxu0 0.0
  %942 = vmatprep.subr.mxu0 0.0
  %943 = vmatpush2.msra.mxu0 0.0
  %944 = vmatprep.subr.mxu0 0.0
  %945 = vmatpush2.msra.mxu0 0.0
  %946 = vmatprep.subr.mxu0 0.0
  %947 = vmatpush2.msra.mxu0 0.0
  %948 = vmatprep.subr.mxu0 0.0
  %949 = vmatpush2.msra.mxu0 0.0
  %950 = vmatprep.mubr.f32.mxu0 0.0
  %951 = vmatmul.mubr.f32.gmra.mxu0 %v881
  %v952 = vpop.f32.mrf.mxu0
  %v953 = vadd.f32 %v872, %v952
  %v954 = vpop.f32.mrf.mxu0
  %955 = vmatprep.mubr.f32.mxu0 0.0
  %956 = vmatmul.mubr.f32.gmra.mxu0 %v884
  %v957 = vpop.f32.mrf.mxu0
  %v958 = vadd.f32 %v877, %v957
  %v959 = vpop.f32.mrf.mxu0
  %960 = vdwg.mxu0
  %v961 = vtanh.pop %v953
  %v962 = vtanh.pop %v958
  %v963 = vld [vmem:[%s13] sm:$0xf]
  %v964 = vld [vmem:[%s14] sm:$0xf]
  %966 = vset.pattern.permute.xlu0 0
  %967 = vperm.xlu0 %966, %v964
  %v968 = vpop.permute.xlu0 %967
  %v971 = vsel %vm879, %v963, 0
  %973 = vmatprep.subr.mxu0 0.0
  %974 = vmatpush1.msra.mxu0 0.0
  %975 = vmatprep.subr.mxu0 0.0
  %976 = vmatpush1.msra.mxu0 0.0
  %977 = vmatprep.subr.mxu0 0.0
  %978 = vmatpush1.msra.mxu0 0.0
  %979 = vmatprep.subr.mxu0 0.0
  %980 = vmatpush1.msra.mxu0 0.0
  %981 = vmatprep.subr.mxu0 0.0
  %982 = vmatpush1.msra.mxu0 0.0
  %983 = vmatprep.subr.mxu0 0.0
  %984 = vmatpush1.msra.mxu0 0.0
  %985 = vmatprep.subr.mxu0 0.0
  %986 = vmatpush1.msra.mxu0 0.0
  %987 = vmatprep.subr.mxu0 0.0
  %988 = vmatpush1.msra.mxu0 0.0
  %989 = vmatprep.subr.mxu0 0.0
  %990 = vmatpush1.msra.mxu0 0.0
  %991 = vmatprep.subr.mxu0 0.0
  %992 = vmatpush1.msra.mxu0 0.0
  %993 = vmatprep.subr.mxu0 0.0
  %994 = vmatpush1.msra.mxu0 0.0
  %995 = vmatprep.subr.mxu0 0.0
  %996 = vmatpush1.msra.mxu0 0.0
  %997 = vmatprep.subr.mxu0 0.0
  %998 = vmatpush1.msra.mxu0 0.0
  %999 = vmatprep.subr.mxu0 0.0
  %1000 = vmatpush1.msra.mxu0 0.0
  %1001 = vmatprep.subr.mxu0 0.0
  %1002 = vmatpush1.msra.mxu0 %v962
  %1003 = vmatprep.subr.mxu0 0.0
  %1004 = vmatpush1.msra.mxu0 %v961
  %1005 = vmatprep.subr.mxu0 0.0
  %1006 = vmatpush2.msra.mxu0 0.0
  %1007 = vmatprep.subr.mxu0 0.0
  %1008 = vmatpush2.msra.mxu0 0.0
  %1009 = vmatprep.subr.mxu0 0.0
  %1010 = vmatpush2.msra.mxu0 0.0
  %1011 = vmatprep.subr.mxu0 0.0
  %1012 = vmatpush2.msra.mxu0 0.0
  %1013 = vmatprep.subr.mxu0 0.0
  %1014 = vmatpush2.msra.mxu0 0.0
  %1015 = vmatprep.subr.mxu0 0.0
  %1016 = vmatpush2.msra.mxu0 0.0
  %1017 = vmatprep.subr.mxu0 0.0
  %1018 = vmatpush2.msra.mxu0 0.0
  %1019 = vmatprep.subr.mxu0 0.0
  %1020 = vmatpush2.msra.mxu0 0.0
  %1021 = vmatprep.subr.mxu0 0.0
  %1022 = vmatpush2.msra.mxu0 0.0
  %1023 = vmatprep.subr.mxu0 0.0
  %1024 = vmatpush2.msra.mxu0 0.0
  %1025 = vmatprep.subr.mxu0 0.0
  %1026 = vmatpush2.msra.mxu0 0.0
  %1027 = vmatprep.subr.mxu0 0.0
  %1028 = vmatpush2.msra.mxu0 0.0
  %1029 = vmatprep.subr.mxu0 0.0
  %1030 = vmatpush2.msra.mxu0 0.0
  %1031 = vmatprep.subr.mxu0 0.0
  %1032 = vmatpush2.msra.mxu0 0.0
  %1033 = vmatprep.subr.mxu0 0.0
  %1034 = vmatpush2.msra.mxu0 0.0
  %1035 = vmatprep.subr.mxu0 0.0
  %1036 = vmatpush2.msra.mxu0 0.0
  %1037 = vmatprep.mubr.f32.mxu0 0.0
  %1038 = vmatmul.mubr.f32.gmra.mxu0 %v971
  %v1039 = vpop.f32.mrf.mxu0
  %v1040 = vadd.f32 %v968, %v1039
  %v1041 = vpop.f32.mrf.mxu0
  %1042 = vdwg.mxu0
  %1043 = vst [vmem:[%s15] sm:$0xf] %v1040
  // Predicated region
  $region62: #{_forward_impl.1} parent=0 // pred_check
    _
  $region63: #{_forward_impl.1} parent=0 // pred_check_branch
    %1045 = sbr.rel (0) target = $region65
  $region64: #{_forward_impl.1} parent=0 // pred_region
    _
  $region65: #{_forward_impl.1} parent=0 // pred_fallthru
    _
  // Predicated region
  $region66: #{_forward_impl.1} parent=0 // pred_check
    _
  $region67: #{_forward_impl.1} parent=0 // pred_check_branch
    %1047 = sbr.rel (0) target = $region69
  $region68: #{_forward_impl.1} parent=0 // pred_region
    _
  $region69: #{_forward_impl.1} parent=0 // pred_fallthru
    _

</llo_original>
